<compile_context>
chip_gen: v5e
topology: v5e:2x2
jax: 0.10.0
libtpu: 0.0.40
codegen_flags: <defaults>
</compile_context>

<pallas_src>
import functools

import jax
import jax.numpy as jnp
from jax.experimental import pallas as pl
from jax.experimental.pallas import tpu as pltpu


def _layernorm_kernel(x_ref, gamma_ref, beta_ref, o_ref, *, eps, hidden, lane_padded):
    # x_ref: (tile_rows, hidden_padded); gamma/beta: (1, hidden_padded)
    x = x_ref[...].astype(jnp.float32)
    inv_hidden = 1.0 / hidden  # true hidden, not padded

    # Mean: padded lanes of x are zero (wrapper pads with 0), so the plain sum is exact.
    s1 = jnp.sum(x, axis=-1, keepdims=True)
    mean = s1 * inv_hidden

    # Two-pass variance (centered) — avoids E[x^2] - E[x]^2 cancellation.
    xm = x - mean
    if lane_padded:
        lane = jax.lax.broadcasted_iota(jnp.int32, x.shape, dimension=1)
        xm = jnp.where(lane < hidden, xm, 0.0)
    var = jnp.sum(xm * xm, axis=-1, keepdims=True) * inv_hidden
    inv = jax.lax.rsqrt(var + eps)  # EUP

    g = gamma_ref[...].astype(jnp.float32)
    b = beta_ref[...].astype(jnp.float32)

    # Direct affine: no folded scale/shift temporaries (per-row * per-lane fold
    # would materialize two extra full-tile f32 values).
    o_ref[...] = ((xm * inv) * g + b).astype(o_ref.dtype)


def _chip_info():
    """Return (pipeline-buffer budget bytes, vmem_limit_bytes, min_grid_steps)."""
    kind = ""
    try:
        kind = jax.devices()[0].device_kind.lower()
    except Exception:
        pass
    if "v7" in kind or "7x" in kind:
        # v7x: 64 MiB physical VMEM per TC. Keep the tile budget conservative and
        # the scoped limit explicit (~8 MiB headroom for compiler scratch).
        # 2 TensorCores -> want >= 2 steps per core for pipelining.
        return 32 * 1024 * 1024, 56 * 1024 * 1024, 4
    # v5e / v6e: 128 MiB VMEM; raise the scoped limit above the 16/32 MiB defaults.
    return 64 * 1024 * 1024, 96 * 1024 * 1024, 2


def _pick_tile_rows(rows, hidden_padded, dtype, buf_budget, min_steps):
    """Pick a row tile: large blocks bounded by VMEM budget (I/O + f32 temps)."""
    itemsize = jnp.dtype(dtype).itemsize
    sublane = {4: 8, 2: 16, 1: 32}.get(itemsize, 8)

    if rows <= sublane:
        # Single block equal to the full row extent (satisfies the (8,128) rule).
        return rows

    # Per-row working set:
    #   double-buffered input + output tiles in source dtype: 4 * itemsize * hidden
    #   ~2 full-tile f32 temporaries (upcast x / xm, product):  8 * hidden
    row_bytes = (4 * itemsize + 8) * hidden_padded
    t = buf_budget // row_bytes

    # Byte-based block cap: <= 8 MiB per input block per step (>= 2 MiB blocks already
    # sit at ~85% of HBM roofline; bigger only amortizes the ~0.35 us/step overhead).
    blk_cap = (8 * 1024 * 1024) // (hidden_padded * itemsize)
    t = min(t, blk_cap)
    t = max(sublane, (t // sublane) * sublane)

    # Guarantee at least `min_steps` grid steps so the DMA pipeline (and v7x's two
    # TensorCores under dimension_semantics=("parallel",)) have work to overlap.
    t_steps = -(-rows // min_steps)
    t_steps = ((t_steps + sublane - 1) // sublane) * sublane
    t = max(sublane, min(t, t_steps))
    return t


def layer_norm(x, gamma, beta, *, eps=1e-5, tile_rows=None):
    """LayerNorm over the last axis of x, matching torch.nn.LayerNorm semantics.

    x: arbitrary leading dims, last dim = normalized_shape (int case).
    gamma, beta: shape (hidden,).
    """
    orig_shape = x.shape
    hidden = orig_shape[-1]
    rows = 1
    for d in orig_shape[:-1]:
        rows *= d

    x2 = x.reshape(rows, hidden)
    gamma2 = gamma.reshape(1, hidden)
    beta2 = beta.reshape(1, hidden)

    # Lane-dense layout: pad hidden to a multiple of 128 so output stores are
    # unmasked vst. Padded lanes: x=0, gamma=1, beta=0; stats mask them inside
    # the kernel; padded output lanes are sliced off below.
    hidden_padded = ((hidden + 127) // 128) * 128
    lane_padded = hidden_padded != hidden
    if lane_padded:
        pad = hidden_padded - hidden
        x2 = jnp.pad(x2, ((0, 0), (0, pad)))
        gamma2 = jnp.pad(gamma2, ((0, 0), (0, pad)), constant_values=1)
        beta2 = jnp.pad(beta2, ((0, 0), (0, pad)), constant_values=0)

    buf_budget, vmem_limit, min_steps = _chip_info()
    if tile_rows is None:
        tile_rows = _pick_tile_rows(rows, hidden_padded, x.dtype, buf_budget, min_steps)

    # Ragged last row-block is fine: Pallas pads reads and masks writes; rows are independent.
    grid = (pl.cdiv(rows, tile_rows),)

    itemsize = jnp.dtype(x.dtype).itemsize
    param_bytes = 2 * hidden_padded * jnp.dtype(gamma.dtype).itemsize
    cost = pl.CostEstimate(
        flops=9 * rows * hidden_padded,
        transcendentals=rows,
        bytes_accessed=2 * rows * hidden_padded * itemsize + param_bytes,
    )

    out = pl.pallas_call(
        functools.partial(
            _layernorm_kernel, eps=eps, hidden=hidden, lane_padded=lane_padded
        ),
        out_shape=jax.ShapeDtypeStruct((rows, hidden_padded), x.dtype),
        grid_spec=pltpu.PrefetchScalarGridSpec(
            num_scalar_prefetch=0,
            grid=grid,
            in_specs=[
                pl.BlockSpec((tile_rows, hidden_padded), lambda i: (i, 0)),
                pl.BlockSpec((1, hidden_padded), lambda i: (0, 0)),
                pl.BlockSpec((1, hidden_padded), lambda i: (0, 0)),
            ],
            out_specs=pl.BlockSpec((tile_rows, hidden_padded), lambda i: (i, 0)),
        ),
        compiler_params=pltpu.CompilerParams(
            dimension_semantics=("parallel",),
            vmem_limit_bytes=vmem_limit,
        ),
        cost_estimate=cost,
    )(x2, gamma2, beta2)

    if lane_padded:
        out = out[:, :hidden]
    return out.reshape(orig_shape)


if __name__ == "__main__":
    key = jax.random.PRNGKey(0)
    batch, seq, hidden = 2, 8, 32  # normalized_shape = hidden = 32
    eps = 1e-5

    kx, kg, kb = jax.random.split(key, 3)
    x = jax.random.normal(kx, (batch, seq, hidden), dtype=jnp.float32)
    # torch.nn.LayerNorm init: weight=1, bias=0. Perturb deterministically so the
    # affine path is actually exercised.
    gamma = jnp.ones((hidden,), jnp.float32) + 0.1 * jax.random.normal(kg, (hidden,), jnp.float32)
    beta = jnp.zeros((hidden,), jnp.float32) + 0.1 * jax.random.normal(kb, (hidden,), jnp.float32)

    y = layer_norm(x, gamma, beta, eps=eps)
    y = jax.block_until_ready(y)

    # Reference check against plain-JAX LayerNorm (biased variance, like torch).
    xm = x - jnp.mean(x, axis=-1, keepdims=True)
    var = jnp.mean(xm * xm, axis=-1, keepdims=True)
    ref = xm * jax.lax.rsqrt(var + eps) * gamma + beta
    assert jnp.allclose(y, ref, atol=2e-5, rtol=1e-5), float(jnp.max(jnp.abs(y - ref)))

    print("KERNEL_OK")
</pallas_src>

<mosaic_0001>
module attributes {stable_mosaic.version = 11 : i64} {
  func.func @_layernorm_kernel(%arg0: i32, %arg1: memref<8x128xf32, #tpu.memory_space<vmem>>, %arg2: memref<1x128xf32, #tpu.memory_space<vmem>>, %arg3: memref<1x128xf32, #tpu.memory_space<vmem>>, %arg4: memref<8x128xf32, #tpu.memory_space<vmem>>) attributes {dimension_semantics = [#tpu.dimension_semantics<parallel>], iteration_bounds = array<i64: 2>, scalar_prefetch = 0 : i64, scratch_operands = 0 : i64, tpu.core_type = #tpu.core_type<tc>, window_params = [{transform_indices = @transform_0, window_bounds = array<i64: 8, 128>}, {pipeline_mode = #tpu.pipeline_mode<synchronous>, transform_indices = @transform_1, window_bounds = array<i64: 1, 128>}, {pipeline_mode = #tpu.pipeline_mode<synchronous>, transform_indices = @transform_2, window_bounds = array<i64: 1, 128>}, {transform_indices = @transform_3, window_bounds = array<i64: 8, 128>}]} {
    %c0 = arith.constant 0 : index
    %c0_0 = arith.constant 0 : index
    %0 = vector.load %arg1[%c0, %c0_0] : memref<8x128xf32, #tpu.memory_space<vmem>>, vector<8x128xf32>
    %cst = arith.constant dense<0.000000e+00> : vector<8xf32>
    %1 = vector.multi_reduction <add>, %0, %cst [1] : vector<8x128xf32> to vector<8xf32>
    %2 = vector.shape_cast %1 : vector<8xf32> to vector<8x1xf32>
    %cst_1 = arith.constant 3.125000e-02 : f32
    %3 = vector.broadcast %cst_1 : f32 to vector<8x1xf32>
    %4 = arith.mulf %2, %3 : vector<8x1xf32>
    %5 = vector.broadcast %4 : vector<8x1xf32> to vector<8x128xf32>
    %6 = arith.subf %0, %5 : vector<8x128xf32>
    %7 = tpu.iota {dimensions = array<i32: 1>} : vector<8x128xi32>
    %c32_i32 = arith.constant 32 : i32
    %8 = vector.broadcast %c32_i32 : i32 to vector<8x128xi32>
    %9 = arith.cmpi slt, %7, %8 : vector<8x128xi32>
    %cst_2 = arith.constant 0.000000e+00 : f32
    %10 = vector.broadcast %cst_2 : f32 to vector<8x128xf32>
    %11 = arith.select %9, %6, %10 : vector<8x128xi1>, vector<8x128xf32>
    %12 = arith.mulf %11, %11 : vector<8x128xf32>
    %cst_3 = arith.constant dense<0.000000e+00> : vector<8xf32>
    %13 = vector.multi_reduction <add>, %12, %cst_3 [1] : vector<8x128xf32> to vector<8xf32>
    %14 = vector.shape_cast %13 : vector<8xf32> to vector<8x1xf32>
    %cst_4 = arith.constant 3.125000e-02 : f32
    %15 = vector.broadcast %cst_4 : f32 to vector<8x1xf32>
    %16 = arith.mulf %14, %15 : vector<8x1xf32>
    %cst_5 = arith.constant 9.99999974E-6 : f32
    %17 = vector.broadcast %cst_5 : f32 to vector<8x1xf32>
    %18 = arith.addf %16, %17 : vector<8x1xf32>
    %19 = math.rsqrt %18 : vector<8x1xf32>
    %c0_6 = arith.constant 0 : index
    %c0_7 = arith.constant 0 : index
    %20 = vector.load %arg2[%c0_6, %c0_7] : memref<1x128xf32, #tpu.memory_space<vmem>>, vector<1x128xf32>
    %c0_8 = arith.constant 0 : index
    %c0_9 = arith.constant 0 : index
    %21 = vector.load %arg3[%c0_8, %c0_9] : memref<1x128xf32, #tpu.memory_space<vmem>>, vector<1x128xf32>
    %22 = vector.broadcast %19 : vector<8x1xf32> to vector<8x128xf32>
    %23 = arith.mulf %11, %22 : vector<8x128xf32>
    %24 = vector.broadcast %20 : vector<1x128xf32> to vector<8x128xf32>
    %25 = arith.mulf %23, %24 : vector<8x128xf32>
    %26 = vector.broadcast %21 : vector<1x128xf32> to vector<8x128xf32>
    %27 = arith.addf %25, %26 : vector<8x128xf32>
    %c0_10 = arith.constant 0 : index
    %c0_11 = arith.constant 0 : index
    %28 = vector.load %arg4[%c0_10, %c0_11] : memref<8x128xf32, #tpu.memory_space<vmem>>, vector<8x128xf32>
    tpu.vector_store %arg4[%c0_10, %c0_11], %27 {strides = array<i32>} : memref<8x128xf32, #tpu.memory_space<vmem>>, vector<8x128xf32>,
    return
  }
  func.func @transform_0(%arg0: i32) -> (i32, i32) {
    %c0_i32 = arith.constant 0 : i32
    %c0_i32_0 = arith.constant 0 : i32
    return %arg0, %c0_i32 : i32, i32
  }
  func.func @transform_1(%arg0: i32) -> (i32, i32) {
    %c0_i32 = arith.constant 0 : i32
    %c0_i32_0 = arith.constant 0 : i32
    %c0_i32_1 = arith.constant 0 : i32
    return %c0_i32, %c0_i32_0 : i32, i32
  }
  func.func @transform_2(%arg0: i32) -> (i32, i32) {
    %c0_i32 = arith.constant 0 : i32
    %c0_i32_0 = arith.constant 0 : i32
    %c0_i32_1 = arith.constant 0 : i32
    return %c0_i32, %c0_i32_0 : i32, i32
  }
  func.func @transform_3(%arg0: i32) -> (i32, i32) {
    %c0_i32 = arith.constant 0 : i32
    %c0_i32_0 = arith.constant 0 : i32
    return %arg0, %c0_i32 : i32, i32
  }
}

</mosaic_0001>

<llo_original>
// kernel: tpu_custom_call.1
$region0: #{tpu_custom_call.1}
  #allocation0 [shape = 'u32[]', space=smem, size = 0x4, offset = 0x4, fixed_abs, tag = 'smem constant byte address 0x4 - core index']
  #allocation1 [shape = 'u32[72,128]{1,0:T(1,128)}', space=vmem, size = 0x9000, scoped, tag = 'internal scratch']
  %s0 = inlined_call_operand.hbm [shape: f32[16,128], index: 0, kind: input, shape index: {}]
  %s1 = inlined_call_operand.hbm [shape: f32[1,128], index: 1, kind: input, shape index: {}]
  %s2 = inlined_call_operand.vmem [shape: f32[1,128], index: 2, kind: input, shape index: {}]
  %s3 = inlined_call_operand.hbm [shape: f32[16,128], index: 3, kind: output, shape index: {}]
  %s4 = sld [smem:[#allocation0]]
  $region53: #{tpu_custom_call.1} parent=0
    _
  %s6 = ssub.s32 1, %s4
  %s7 = scalar_select 0, %s6, %s4
  $region1: #{tpu_custom_call.1} parent=0
    #allocation2 [shape = 'u8[8192]{0}', space=vmem, size = 0x2000, scoped, tag = 'input window, operand 0']
    #allocation3 [shape = 's32[2]{0}', space=sflag, size = 0x8, scoped, tag = 'scoped memory for tpu_custom_call.1']
    #allocation4 [shape = 's32[2]{0}', space=sflag, size = 0x8, scoped, tag = 'scoped memory for tpu_custom_call.1']
    #allocation5 [shape = 'u8[512]{0}', space=vmem, size = 0x400, scoped, tag = 'input window, operand 1, single buffered']
    #allocation6 [shape = 's32[1]{0}', space=sflag, size = 0x4, scoped, tag = 'scoped memory for tpu_custom_call.1']
    #allocation7 [shape = 'u8[8192]{0}', space=vmem, size = 0x2000, scoped, tag = 'output window, operand 0']
    %8 = vsyncpa [#allocation3], 0
    %s9 = scalar_lea.sflag [#allocation3], 1
    %10 = vsyncpa %s9, 0
    %11 = vsyncpa [#allocation6], 0
    %12 = vsyncpa [#allocation4], 0
    %s13 = scalar_lea.sflag [#allocation4], 1
    %14 = vsyncpa %s13, 0
    loop: start=0, step=1, limit=4
    $region2: #{tpu_custom_call.1} parent=1 // loop_pre_header
      _
    $region3: #{tpu_custom_call.1} parent=1 // loop_header
      %s16 = sphi 0, %s20
      %p17 = scmp.ge.s32.totalorder %s16, 4
      %s26 = sphi 0, %s28
      %s29 = sphi 0, %s26
      %s30 = sphi 0, %s29
      %s46 = sphi 0, %s30
      %s50 = sphi 0, %s50
      %s52 = sphi 0, %s50
      %s53 = sphi 0, %s52
      %s67 = sphi 0, %s53
      %s71 = sphi 0, %s71
      %s73 = sphi 0, %s71
      %s74 = sphi 0, %s73
      %s88 = sphi 0, %s74
      %s94 = sphi 0, %s96
      %s97 = sphi 0, %s94
      %s98 = sphi 0, %s97
      %s114 = sphi 0, %s98
    $region4: #{tpu_custom_call.1} parent=1 // loop_header_branch
      %19 = sbr.rel (%p17) target = $region8
    $region5: #{tpu_custom_call.1} parent=1 // loop_body
      %s21 = ssub.s32 %s16, 1
      %s22 = ssub.s32 %s16, 2
      %s23 = sadd.s32 %s16, 1
      %s24 = ssub.s32 %s16, %s23
      %p25 = scmp.eq.s32.totalorder %s24, 0
      %s27 = sadd.s32 %s26, 1
      %s28 = scalar_select %p25, %s26, %s27
      %p31 = pneg %p25
      %p32 = scmp.eq.s32.totalorder %s16, 1
      %p33 = por %p31, %p32
      %p34 = scmp.ne.s32.totalorder %s26, %s29
      %p35 = scmp.eq.s32.totalorder %s16, 0
      %p36 = por %p34, %p35
      %p37 = scmp.ne.s32.totalorder %s26, %s29
      %p38 = scmp.eq.s32.totalorder %s21, 1
      %p39 = por %p37, %p38
      %p40 = scmp.ne.s32.totalorder %s29, %s30
      %p41 = scmp.eq.s32.totalorder %s21, 0
      %p42 = por %p40, %p41
      %p43 = scmp.ne.s32.totalorder %s29, %s30
      %p44 = scmp.eq.s32.totalorder %s22, 1
      %p45 = por %p43, %p44
      %p47 = scmp.ne.s32.totalorder %s30, %s46
      %p48 = scmp.eq.s32.totalorder %s22, 0
      %p49 = por %p47, %p48
      %s51 = sadd.s32 %s50, 1
      %p54 = scmp.eq.s32.totalorder %s16, 1
      %p55 = scmp.ne.s32.totalorder %s50, %s52
      %p56 = scmp.eq.s32.totalorder %s16, 0
      %p57 = por %p55, %p56
      %p58 = scmp.ne.s32.totalorder %s50, %s52
      %p59 = scmp.eq.s32.totalorder %s21, 1
      %p60 = por %p58, %p59
      %p61 = scmp.ne.s32.totalorder %s52, %s53
      %p62 = scmp.eq.s32.totalorder %s21, 0
      %p63 = por %p61, %p62
      %p64 = scmp.ne.s32.totalorder %s52, %s53
      %p65 = scmp.eq.s32.totalorder %s22, 1
      %p66 = por %p64, %p65
      %p68 = scmp.ne.s32.totalorder %s53, %s67
      %p69 = scmp.eq.s32.totalorder %s22, 0
      %p70 = por %p68, %p69
      %s72 = sadd.s32 %s71, 1
      %p75 = scmp.eq.s32.totalorder %s16, 1
      %p76 = scmp.ne.s32.totalorder %s71, %s73
      %p77 = scmp.eq.s32.totalorder %s16, 0
      %p78 = por %p76, %p77
      %p79 = scmp.ne.s32.totalorder %s71, %s73
      %p80 = scmp.eq.s32.totalorder %s21, 1
      %p81 = por %p79, %p80
      %p82 = scmp.ne.s32.totalorder %s73, %s74
      %p83 = scmp.eq.s32.totalorder %s21, 0
      %p84 = por %p82, %p83
      %p85 = scmp.ne.s32.totalorder %s73, %s74
      %p86 = scmp.eq.s32.totalorder %s22, 1
      %p87 = por %p85, %p86
      %p89 = scmp.ne.s32.totalorder %s74, %s88
      %p90 = scmp.eq.s32.totalorder %s22, 0
      %p91 = por %p89, %p90
      %s92 = ssub.s32 %s16, %s23
      %p93 = scmp.eq.s32.totalorder %s92, 0
      %s95 = sadd.s32 %s94, 1
      %s96 = scalar_select %p93, %s94, %s95
      %p99 = pneg %p93
      %p100 = scmp.eq.s32.totalorder %s16, 1
      %p101 = por %p99, %p100
      %p102 = scmp.ne.s32.totalorder %s94, %s97
      %p103 = scmp.eq.s32.totalorder %s16, 0
      %p104 = por %p102, %p103
      %p105 = scmp.ne.s32.totalorder %s94, %s97
      %p106 = scmp.eq.s32.totalorder %s21, 1
      %p107 = por %p105, %p106
      %p108 = scmp.ne.s32.totalorder %s97, %s98
      %p109 = scmp.eq.s32.totalorder %s21, 0
      %p110 = por %p108, %p109
      %p111 = scmp.ne.s32.totalorder %s97, %s98
      %p112 = scmp.eq.s32.totalorder %s22, 1
      %p113 = por %p111, %p112
      %p115 = scmp.ne.s32.totalorder %s98, %s114
      %p116 = scmp.eq.s32.totalorder %s22, 0
      %p117 = por %p115, %p116
      %p118 = scmp.le.s32.totalorder 1, %s16
      %p119 = scmp.lt.s32.totalorder %s16, 3
      %p120 = pnand %p118, %p119
      %p121 = pneg %p120
      // Predicated region
      $region9: #{tpu_custom_call.1} parent=5 // pred_check
        _
      $region10: #{tpu_custom_call.1} parent=5 // pred_check_branch
        %123 = sbr.rel (%p120) target = $region12
      $region11: #{tpu_custom_call.1} parent=5 // pred_region
        %s124 = ssub.s32 %s16, 1
        // Predicated region
        $region13: #{tpu_custom_call.1} parent=11 // pred_check
          %p125 = pneg %p63
        $region14: #{tpu_custom_call.1} parent=11 // pred_check_branch
          %127 = sbr.rel (%p125) target = $region16
        $region15: #{tpu_custom_call.1} parent=11 // pred_region
          %129 = vsyncadd [#allocation6], 0
          %s131 = sshll.u32 %s1, 4
          %s132 = int_to_ptr.hbm [resolvable:$true] %s131
          %s133 = sshll.u32 [#allocation5], 4
          %s134 = int_to_ptr.vmem [resolvable:$true] %s133
          %136 = dma.hbm_to_vmem [thread:$0]  %s132, 16, %s134, [#allocation6]
        $region16: #{tpu_custom_call.1} parent=11 // pred_fallthru
          _
        // Predicated region
        $region17: #{tpu_custom_call.1} parent=11 // pred_check
          %p137 = pneg %p84
        $region18: #{tpu_custom_call.1} parent=11 // pred_check_branch
          %139 = sbr.rel (%p137) target = $region20
        $region19: #{tpu_custom_call.1} parent=11 // pred_region
          _
        $region20: #{tpu_custom_call.1} parent=11 // pred_fallthru
          _
      $region12: #{tpu_custom_call.1} parent=5 // pred_fallthru
        _
      %p140 = scmp.lt.s32.totalorder %s16, 2
      // Predicated region
      $region21: #{tpu_custom_call.1} parent=5 // pred_check
        %p141 = pneg %p140
      $region22: #{tpu_custom_call.1} parent=5 // pred_check_branch
        %143 = sbr.rel (%p141) target = $region24
      $region23: #{tpu_custom_call.1} parent=5 // pred_region
        // Predicated region
        $region25: #{tpu_custom_call.1} parent=23 // pred_check
          %p144 = pneg %p36
        $region26: #{tpu_custom_call.1} parent=23 // pred_check_branch
          %146 = sbr.rel (%p144) target = $region28
        $region27: #{tpu_custom_call.1} parent=23 // pred_region
          %s147 = sand.u32 %s26, 1
          %s148 = scalar_lea.sflag [#allocation3], %s147
          %s149 = sand.u32 %s26, 1
          %s150 = smul.addr %s149, 8
          %s151 = scalar_lea.vmem [#allocation2], %s150
          %153 = vsyncadd %s148, 0
          %s154 = smul.addr %s16, 8
          %s155 = scalar_lea.hbm %s0, %s154
          %s157 = sshll.u32 %s155, 4
          %s158 = int_to_ptr.hbm [resolvable:$true] %s157
          %s159 = sshll.u32 %s151, 4
          %s160 = int_to_ptr.vmem [resolvable:$true] %s159
          %162 = dma.hbm_to_vmem [thread:$0]  %s158, 128, %s160, %s148
        $region28: #{tpu_custom_call.1} parent=23 // pred_fallthru
          _
      $region24: #{tpu_custom_call.1} parent=5 // pred_fallthru
        _
      %p163 = scmp.le.s32.totalorder 1, %s16
      %p164 = scmp.lt.s32.totalorder %s16, 3
      %p165 = pnand %p163, %p164
      %p166 = pneg %p165
      // Predicated region
      $region29: #{tpu_custom_call.1} parent=5 // pred_check
        _
      $region30: #{tpu_custom_call.1} parent=5 // pred_check_branch
        %168 = sbr.rel (%p165) target = $region32
      $region31: #{tpu_custom_call.1} parent=5 // pred_region
        %s169 = ssub.s32 %s16, 1
        %s170 = sand.u32 %s29, 1
        %s171 = scalar_lea.sflag [#allocation3], %s170
        %s172 = sand.u32 %s29, 1
        %s173 = smul.addr %s172, 8
        %s174 = scalar_lea.vmem [#allocation2], %s173
        // Predicated region
        $region33: #{tpu_custom_call.1} parent=31 // pred_check
          %p175 = pneg %p42
        $region34: #{tpu_custom_call.1} parent=31 // pred_check_branch
          %177 = sbr.rel (%p175) target = $region36
        $region35: #{tpu_custom_call.1} parent=31 // pred_region
          %179 = dma.done %s171, 128
        $region36: #{tpu_custom_call.1} parent=31 // pred_fallthru
          _
        // Predicated region
        $region37: #{tpu_custom_call.1} parent=31 // pred_check
          %p180 = pneg %p63
        $region38: #{tpu_custom_call.1} parent=31 // pred_check_branch
          %182 = sbr.rel (%p180) target = $region40
        $region39: #{tpu_custom_call.1} parent=31 // pred_region
          %184 = dma.done [#allocation6], 16
        $region40: #{tpu_custom_call.1} parent=31 // pred_fallthru
          _
        %s185 = sand.u32 %s29, 1
        %s186 = scalar_lea.sflag [#allocation3], %s185
        %s187 = sand.u32 %s29, 1
        %s188 = smul.addr %s187, 8
        %s189 = scalar_lea.vmem [#allocation2], %s188
        %p190 = pneg %p42
        %p191 = pneg %p39
        %p192 = pneg %p63
        %p193 = pneg %p60
        %p194 = pneg %p84
        %p195 = pneg %p81
        %p196 = pneg %p110
        %p197 = pneg %p107
        %s198 = sand.u32 %s97, 1
        %s199 = scalar_lea.sflag [#allocation4], %s198
        %s200 = sand.u32 %s97, 1
        %s201 = smul.addr %s200, 8
        %s202 = scalar_lea.vmem [#allocation7], %s201
        %v203 = vld [vmem:[%s174] sm:$0xff]
        %204 = vadd.xlane.f32.xlu0 %v203
        %v205 = vpop.xlane.xlu0 %204
        %v206 = vmul.f32 %v205, 0.03125
        %v207 = vsub.f32 %v203, %v206
        %v208 = vlaneseq
        %v209 = vand.u32 %v208, 127
        %vm210 = vcmp.lt.s32.totalorder %v209, 32
        %v211 = vsel %vm210, %v207, 0.0
        %v212 = vmul.f32 %v211, %v211
        %213 = vadd.xlane.f32.xlu0 %v212
        %v214 = vpop.xlane.xlu0 %213
        %v215 = vmul.f32 %v214, 0.03125
        %v216 = vadd.f32 %v215, 1e-05
        %v217 = vrsqrt.pop %v216
        %v218 = vmul.f32 %v217, %v216
        %v219 = vmul.f32 %v218, %v217
        %v220 = vmul.f32 0.5, %v219
        %v221 = vsub.f32 1.5, %v220
        %v222 = vmul.f32 %v217, %v221
        %vm223 = vweird.f32 %v216
        %vm224 = vweird.f32 %v217
        %vm225 = vmor %vm223, %vm224
        %v226 = vsel %vm225, %v217, %v222
        %v227 = vld [vmem:[#allocation5] sm:$0x1]
        %v228 = vld [vmem:[%s2] sm:$0x1]
        %v229 = vmul.f32 %v211, %v226
        %v231 = vperm.slane %v227, 0
        %v233 = vmul.f32 %v229, %v231
        %v235 = vperm.slane %v228, 0
        %v237 = vadd.f32 %v233, %v235
        %238 = vst [vmem:[%s202] sm:$0xff] %v237
        %s239 = sand.u32 %s97, 1
        %s240 = scalar_lea.sflag [#allocation4], %s239
        %s241 = sand.u32 %s97, 1
        %s242 = smul.addr %s241, 8
        %s243 = scalar_lea.vmem [#allocation7], %s242
        // Predicated region
        $region41: #{tpu_custom_call.1} parent=31 // pred_check
          %p244 = pneg %p107
        $region42: #{tpu_custom_call.1} parent=31 // pred_check_branch
          %246 = sbr.rel (%p244) target = $region44
        $region43: #{tpu_custom_call.1} parent=31 // pred_region
          %248 = vsyncadd %s240, 0
          %s249 = smul.addr %s21, 8
          %s250 = scalar_lea.hbm %s3, %s249
          %s252 = sshll.u32 %s243, 4
          %s253 = int_to_ptr.vmem [resolvable:$true] %s252
          %s254 = sshll.u32 %s250, 4
          %s255 = int_to_ptr.hbm [resolvable:$true] %s254
          %257 = dma.vmem_to_hbm [thread:$0]  %s253, 128, %s255, %s240
        $region44: #{tpu_custom_call.1} parent=31 // pred_fallthru
          _
      $region32: #{tpu_custom_call.1} parent=5 // pred_fallthru
        _
      %p258 = scmp.le.s32.totalorder 2, %s16
      // Predicated region
      $region45: #{tpu_custom_call.1} parent=5 // pred_check
        %p259 = pneg %p258
      $region46: #{tpu_custom_call.1} parent=5 // pred_check_branch
        %261 = sbr.rel (%p259) target = $region48
      $region47: #{tpu_custom_call.1} parent=5 // pred_region
        %s262 = ssub.s32 %s16, 2
        // Predicated region
        $region49: #{tpu_custom_call.1} parent=47 // pred_check
          %p263 = pneg %p113
        $region50: #{tpu_custom_call.1} parent=47 // pred_check_branch
          %265 = sbr.rel (%p263) target = $region52
        $region51: #{tpu_custom_call.1} parent=47 // pred_region
          %s266 = sand.u32 %s98, 1
          %s267 = scalar_lea.sflag [#allocation4], %s266
          %s268 = sand.u32 %s98, 1
          %s269 = smul.addr %s268, 8
          %s270 = scalar_lea.vmem [#allocation7], %s269
          %272 = dma.done %s267, 128
        $region52: #{tpu_custom_call.1} parent=47 // pred_fallthru
          _
      $region48: #{tpu_custom_call.1} parent=5 // pred_fallthru
        _
    $region6: #{tpu_custom_call.1} parent=1 // loop_footer
      %s20 = sadd.s32 1, %s16
    $region7: #{tpu_custom_call.1} parent=1 // loop_footer_branch
      %15 = sbr.rel target = $region3
    $region8: #{tpu_custom_call.1} parent=1 // loop_exit
      _
    %273 = vsyncpa [#allocation3], 1
    %s274 = scalar_lea.sflag [#allocation3], 1
    %275 = vsyncpa %s274, 1
    %276 = vsyncpa [#allocation6], 1
    %277 = vsyncpa [#allocation4], 1
    %s278 = scalar_lea.sflag [#allocation4], 1
    %279 = vsyncpa %s278, 1

</llo_original>
